<compile_context>
chip_gen: v5e
topology: v5e:2x2
jax: 0.10.0
libtpu: 0.0.40
codegen_flags: <defaults>
</compile_context>

<pallas_src>
import functools

import numpy as np

import jax
import jax.numpy as jnp
from jax import lax
from jax.experimental import pallas as pl
from jax.experimental.pallas import tpu as pltpu


# ----------------------------------------------------------------------------
# helpers
# ----------------------------------------------------------------------------
def _full_spec(shape):
    """BlockSpec covering the whole array (grid=(1,))."""
    zeros = (0,) * len(shape)
    return pl.BlockSpec(shape, lambda i: zeros)


def _banded_conv_weight(w_hwio, W):
    """(KH, KW, Cin, Cout) -> (KH, W*Cin, W*Cout).

    Folds the KW taps and the W zero-halo of a stride-1 'same' conv into one
    banded matrix per kh tap, so the conv becomes KH MXU matmuls on the
    lane-dense (rows=(n,h), lanes=(w,c)) activation layout."""
    KH, KW, Cin, Cout = w_hwio.shape
    pw = KW // 2
    w_in = jnp.arange(W)[:, None]                       # input column position
    w_out = jnp.arange(W)[None, :]                      # output column position
    kw = w_in - w_out + pw                              # (W, W) tap index
    valid = (kw >= 0) & (kw < KW)
    kw_c = jnp.clip(kw, 0, KW - 1)
    gathered = w_hwio[:, kw_c, :, :]                    # (KH, W, W, Cin, Cout)
    gathered = gathered * valid[None, :, :, None, None].astype(w_hwio.dtype)
    banded = jnp.transpose(gathered, (0, 1, 3, 2, 4))   # (KH, W, Cin, W, Cout)
    return banded.reshape(KH, W * Cin, W * Cout)


@functools.lru_cache(maxsize=None)
def _fc_select_mask(nh, h, o):
    """(NH, H*O) 0/1 mask selecting, for row r, the h == r % H weight block."""
    r_h = np.arange(nh) % h
    col_h = np.arange(h * o) // o
    return jnp.asarray((r_h[:, None] == col_h[None, :]).astype(np.float32))


# ----------------------------------------------------------------------------
# weight nonzero count (init-time only; reduction axis tiled when possible)
# ----------------------------------------------------------------------------
def count_nonzero_total(x2d):
    R, C = x2d.shape
    cb = 1024 if (C % 1024 == 0 and C > 1024) else C

    def kernel(x_ref, o_ref):
        @pl.when(pl.program_id(0) == 0)
        def _():
            o_ref[...] = jnp.zeros_like(o_ref)
        m = (x_ref[...] != 0.0).astype(jnp.int32)
        o_ref[...] += jnp.sum(jnp.sum(m, axis=1, keepdims=True),
                              axis=0, keepdims=True)

    out = pl.pallas_call(
        kernel,
        out_shape=jax.ShapeDtypeStruct((1, 1), jnp.int32),
        grid=(C // cb,),
        in_specs=[pl.BlockSpec((R, cb), lambda i: (0, i))],
        out_specs=pl.BlockSpec((1, 1), lambda i: (0, 0)),
        compiler_params=pltpu.CompilerParams(
            dimension_semantics=("arbitrary",)),
    )(x2d)
    return out[0, 0]


# ----------------------------------------------------------------------------
# single fused kernel: conv1 -> ReLU -> conv2 -> ReLU -> FC, with every
# per-layer nonzero count computed as epilogues on data already in VMEM
# ----------------------------------------------------------------------------
_NCOUNT = 8   # lane-packed counts: [in0, out0, in1, out1, in2, out2, 0, 0]


def _fused_forward_kernel(x_ref, wb1_ref, b1_ref, wb2_ref, b2_ref,
                          wcat_ref, mfc_ref, fold_ref, bfc_ref,
                          y1_ref, y2_ref, logits_ref, cnt_ref,
                          *, N, H, KH):
    NH = N * H
    ph = KH // 2

    # 0/1 grouping matrix G (N, NH): sums the H rows belonging to each sample.
    samp = lax.broadcasted_iota(jnp.int32, (N, NH), 0)
    row = lax.broadcasted_iota(jnp.int32, (N, NH), 1)
    g = (row // H == samp).astype(jnp.float32)

    # per-row image-height index, used for the H-halo boundary masks.
    h_idx = lax.broadcasted_iota(jnp.int32, (NH, 1), 0) % H

    def per_sample_count(mat):
        # f32 0/1-mask matmul: exact while per-sample counts < 2^24.
        # Count path stays f32 even though the MXU operands below are bf16.
        nz = (mat != 0.0).astype(jnp.float32)
        grouped = jnp.dot(g, nz, preferred_element_type=jnp.float32)
        return jnp.sum(grouped, axis=1, keepdims=True).astype(jnp.int32)

    def conv(act, wb_ref, bias):
        # 'same' conv as KH back-to-back MXU matmuls (bf16 operands, f32 acc):
        # the KW taps + W zero-halo are folded into the banded weight, the H
        # halo is an XLU sublane roll + boundary mask (no shift matmuls).
        lhs = []
        for kh in range(KH):                          # static -> unrolled
            d = kh - ph
            if d == 0:
                shifted = act
            else:
                shifted = pltpu.roll(act, shift=(-d) % NH, axis=0)
                valid = (h_idx + d >= 0) & (h_idx + d < H)
                shifted = jnp.where(valid, shifted, 0.0)
            lhs.append(shifted.astype(jnp.bfloat16))
        acc = jnp.zeros((NH, wb_ref.shape[-1]), jnp.float32)
        for kh in range(KH):                          # dots issue back-to-back
            acc = acc + jnp.dot(lhs[kh], wb_ref[kh],
                                preferred_element_type=jnp.float32)
        return acc + bias

    x = x_ref[...]                                    # (NH, W*Cin) f32
    in0 = per_sample_count(x)                         # conv1 input stats

    y1 = conv(x, wb1_ref, b1_ref[...])                # pre-ReLU conv1 output
    y1_ref[...] = y1                                  # lane-dense (NH, W*C1)
    out0 = per_sample_count(y1)

    a1 = jnp.maximum(y1, 0.0)                         # ReLU fused in-kernel
    in1 = per_sample_count(a1)                        # conv2 input stats

    y2 = conv(a1, wb2_ref, b2_ref[...])               # pre-ReLU conv2 output
    y2_ref[...] = y2
    out1 = per_sample_count(y2)

    a2 = jnp.maximum(y2, 0.0)                         # FC input (ReLU fused)
    in2 = per_sample_count(a2)

    # FC epilogue directly on the (rows=(n,h), lanes=(w,c)) layout (no
    # relayout):  R[r, h*O+o] = sum_wc a2[r, wc] * wfc3[h, wc, o]; keep only
    # the h == (r % H) block (mfc), fold the H lane blocks (fold, 0/1), then
    # sum each sample's H rows with the same grouping matrix g (0/1).
    r_all = jnp.dot(a2.astype(jnp.bfloat16), wcat_ref[...],
                    preferred_element_type=jnp.float32)       # (NH, H*O)
    per_row = jnp.dot(r_all * mfc_ref[...], fold_ref[...],
                      preferred_element_type=jnp.float32)      # (NH, O)
    logits = jnp.dot(g, per_row,
                     preferred_element_type=jnp.float32) + bfc_ref[...]
    logits_ref[...] = logits                                   # (N, O)
    out2 = jnp.sum((logits != 0.0).astype(jnp.int32), axis=1, keepdims=True)

    # pack all six per-sample counts into a single lane-packed int32 store
    col = lax.broadcasted_iota(jnp.int32, (1, _NCOUNT), 1)
    packed = jnp.zeros((N, _NCOUNT), jnp.int32)
    for k, c in enumerate((in0, out0, in1, out1, in2, out2)):
        packed = packed + jnp.where(col == k, c, 0)
    cnt_ref[...] = packed


# ----------------------------------------------------------------------------
# parameter preparation (CleanModel.__init__ equivalent: kernel-ready weight
# forms + the per-layer weight nonzero counts, hoisted out of every forward)
# ----------------------------------------------------------------------------
def init_params(key, cin=4, c1=8, c2=8, h=16, w=16, nclass=10):
    ks = jax.random.split(key, 6)

    def sparse_normal(k, shape, scale, thresh):
        v = scale * jax.random.normal(k, shape, jnp.float32)
        return jnp.where(jnp.abs(v) < thresh, 0.0, v)   # inject zeros

    # conv weights kept in HWIO for the kernels (OIHW equivalent in torch)
    w1 = sparse_normal(ks[0], (3, 3, cin, c1), 0.5, 0.25)
    b1 = 0.01 * jax.random.normal(ks[1], (c1,), jnp.float32)
    w2 = sparse_normal(ks[2], (3, 3, c1, c2), 0.5, 0.25)
    b2 = 0.01 * jax.random.normal(ks[3], (c2,), jnp.float32)
    # fc weight in torch layout (out_features, in_features), in = C*H*W (NCHW)
    wfc = sparse_normal(ks[4], (nclass, c2 * h * w), 0.1, 0.05)
    bfc = 0.01 * jax.random.normal(ks[5], (nclass,), jnp.float32)
    return dict(w1=w1, b1=b1, w2=w2, b2=b2, wfc=wfc, bfc=bfc)


def prepare_params(params, H, W):
    w1, b1, w2, b2, wfc, bfc = (params[k] for k in
                                ("w1", "b1", "w2", "b2", "wfc", "bfc"))
    KH, KW, Cin, C1 = w1.shape
    C2 = w2.shape[-1]
    O = wfc.shape[0]
    assert KH % 2 == 1 and KW % 2 == 1, "'same' padding path assumes odd kernels"

    # fc weight: torch (O, C*H*W) NCHW-flat -> (H, W*C2, O) matching the
    # kernel's NHWC lane order, laid out as (W*C2, H*O) so the FC contracts
    # directly against the (rows=(n,h), lanes=(w,c)) conv2 output.
    wfc3 = wfc.reshape(O, C2, H, W).transpose(2, 3, 1, 0).reshape(H, W * C2, O)
    wcat = wfc3.transpose(1, 0, 2).reshape(W * C2, H * O)

    prep = dict(
        # MXU operands stored as bf16 (f32 accumulation inside the kernel)
        wb1=_banded_conv_weight(w1, W).astype(jnp.bfloat16),   # (KH, W*Cin, W*C1)
        b1t=jnp.tile(b1, W).reshape(1, W * C1),
        wb2=_banded_conv_weight(w2, W).astype(jnp.bfloat16),   # (KH, W*C1, W*C2)
        b2t=jnp.tile(b2, W).reshape(1, W * C2),
        wcat=wcat.astype(jnp.bfloat16),                        # (W*C2, H*O)
        fold=jnp.tile(jnp.eye(O, dtype=jnp.float32), (H, 1)),  # (H*O, O) 0/1
        bfc=bfc.reshape(1, O),
        cfg=dict(H=H, W=W, Cin=Cin, C1=C1, C2=C2, O=O, KH=KH),
        # NOTE: *_zeros lists hold NONZERO counts, mirroring the torch wrapper
        weight_zeros=[
            (count_nonzero_total(w1.reshape(-1, C1)), int(w1.size)),
            (count_nonzero_total(w2.reshape(-1, C2)), int(w2.size)),
            (count_nonzero_total(wfc), int(wfc.size)),
        ],
    )
    return prep


# ----------------------------------------------------------------------------
# fused forward + CleanModel bookkeeping
# ----------------------------------------------------------------------------
def fused_forward(x_nchw, prep):
    cfg = prep["cfg"]
    H, W, Cin, C1, C2, O, KH = (cfg[k] for k in
                                ("H", "W", "Cin", "C1", "C2", "O", "KH"))
    N = x_nchw.shape[0]
    NH = N * H
    # NHWC with rows=(n,h), lanes=(w,c): the lane-dense layout the kernel uses
    x2d = jnp.transpose(x_nchw, (0, 2, 3, 1)).reshape(NH, W * Cin)
    mfc = _fc_select_mask(NH, H, O)

    kernel = functools.partial(_fused_forward_kernel, N=N, H=H, KH=KH)
    operands = (x2d, prep["wb1"], prep["b1t"], prep["wb2"], prep["b2t"],
                prep["wcat"], mfc, prep["fold"], prep["bfc"])
    out_shapes = (
        jax.ShapeDtypeStruct((NH, W * C1), jnp.float32),   # y1 (pre-ReLU)
        jax.ShapeDtypeStruct((NH, W * C2), jnp.float32),   # y2 (pre-ReLU)
        jax.ShapeDtypeStruct((N, O), jnp.float32),         # logits
        jax.ShapeDtypeStruct((N, _NCOUNT), jnp.int32),     # packed counts
    )
    # grid=(1,): at N=2 / 16x16 the forward is launch-latency bound; batch
    # tiling over row-blocks of NH (multiples of 8*H) + "parallel" semantics
    # is the scaling path once N grows (and the VMEM budget on v7x is 64 MiB).
    y1, y2, logits, counts = pl.pallas_call(
        kernel,
        out_shape=out_shapes,
        grid=(1,),
        in_specs=[_full_spec(a.shape) for a in operands],
        out_specs=tuple(_full_spec(s.shape) for s in out_shapes),
        compiler_params=pltpu.CompilerParams(
            dimension_semantics=("arbitrary",)),
    )(*operands)
    return y1, y2, logits, counts


def run_clean(x_nchw, prep, layer_id=-1):
    """Equivalent of CleanModel.run_clean(img, layer_id).

    Hooked layers: [conv1, conv2, fc]; clean outputs reported in torch (NCHW)
    layout; the *_zeros tuples hold (nonzero count, per-sample element count),
    mirroring the torch wrapper's num_nonzeros bookkeeping."""
    cfg = prep["cfg"]
    H, W, Cin, C1, C2, O = (cfg[k] for k in ("H", "W", "Cin", "C1", "C2", "O"))
    N = x_nchw.shape[0]

    y1, y2, logits, counts = fused_forward(x_nchw, prep)

    per_in = (counts[:, 0], counts[:, 2], counts[:, 4])
    per_out = (counts[:, 1], counts[:, 3], counts[:, 5])
    in_numel = (Cin * H * W, C1 * H * W, C2 * H * W)
    out_numel = (C1 * H * W, C2 * H * W, O)

    def torch_layout(ind):
        # NCHW transpose only materialized for layers that are recorded
        if ind == 0:
            return jnp.transpose(y1.reshape(N, H, W, C1), (0, 3, 1, 2))
        if ind == 1:
            return jnp.transpose(y2.reshape(N, H, W, C2), (0, 3, 1, 2))
        return logits

    clean_outputs, input_zeros, output_zeros = [], [], []
    for ind in range(3):
        if ind == layer_id or layer_id == -1:
            clean_outputs.append(torch_layout(ind))
            input_zeros.append((per_in[ind], in_numel[ind]))
            output_zeros.append((per_out[ind], out_numel[ind]))
        else:
            clean_outputs.append(None)
            input_zeros.append(None)
            output_zeros.append(None)

    # TODO(synk): register_forward_hook / .to(device) / target_id mutation are
    # host-side Python side effects with no kernel equivalent; replicated here
    # as plain Python bookkeeping around the single Pallas call.
    weight_zeros = prep["weight_zeros"]
    if layer_id == -1:
        return logits, clean_outputs, (output_zeros, input_zeros, weight_zeros)
    return (logits, clean_outputs[layer_id],
            (output_zeros[layer_id], input_zeros[layer_id],
             weight_zeros[layer_id]))


# ----------------------------------------------------------------------------
# pure-JAX reference check.  The reference rounds the MXU operands to bf16
# exactly like the kernel does (math/accumulation stays f32, HIGHEST
# precision), so the float comparisons are tight; count checks are exact.
# ----------------------------------------------------------------------------
def _reference_check(x_nchw, params, outs):
    y1, y2, logits, counts = outs
    N = x_nchw.shape[0]
    rb = lambda t: t.astype(jnp.bfloat16).astype(jnp.float32)
    hp = lax.Precision.HIGHEST
    conv = lambda x, w, b: lax.conv_general_dilated(
        x, w, (1, 1), "SAME",
        dimension_numbers=("NHWC", "HWIO", "NHWC"), precision=hp) + b

    x_nhwc = jnp.transpose(x_nchw, (0, 2, 3, 1))
    r1 = conv(rb(x_nhwc), rb(params["w1"]), params["b1"])
    a1 = jnp.maximum(r1, 0.0)
    r2 = conv(rb(a1), rb(params["w2"]), params["b2"])
    a2 = jnp.maximum(r2, 0.0)
    flat = jnp.transpose(a2, (0, 3, 1, 2)).reshape(N, -1)
    rl = jnp.dot(rb(flat), rb(params["wfc"]).T, precision=hp) + params["bfc"]

    H, W, C1, C2 = r1.shape[1], r1.shape[2], r1.shape[3], r2.shape[3]
    assert jnp.allclose(y1.reshape(N, H, W, C1), r1, atol=1e-2, rtol=1e-3)
    assert jnp.allclose(y2.reshape(N, H, W, C2), r2, atol=5e-2, rtol=1e-3)
    assert jnp.allclose(logits, rl, atol=1e-1, rtol=1e-3)

    # counts are exact w.r.t. the kernel's own recorded activations
    cnt = lambda t: jnp.sum((t.reshape(N, -1) != 0.0).astype(jnp.int32), axis=1)
    assert (counts[:, 0] == cnt(x_nchw)).all()
    assert (counts[:, 1] == cnt(y1)).all()
    assert (counts[:, 2] == cnt(jnp.maximum(y1, 0.0))).all()
    assert (counts[:, 3] == cnt(y2)).all()
    assert (counts[:, 4] == cnt(jnp.maximum(y2, 0.0))).all()
    assert (counts[:, 5] == cnt(logits)).all()


if __name__ == "__main__":
    key = jax.random.PRNGKey(0)
    kx, kp = jax.random.split(key)

    # NCHW input, like the PyTorch module expects.
    x = jax.random.normal(kx, (2, 4, 16, 16), jnp.float32)
    x = jnp.where(jnp.abs(x) < 0.2, 0.0, x)   # some zeros so counts are nontrivial

    params = init_params(kp)
    prep = prepare_params(params, H=16, W=16)   # __init__-time weight stats etc.

    outs = fused_forward(x, prep)
    _reference_check(x, params, outs)

    clean_out, clean_layer_outputs, (out_nz, in_nz, w_nz) = run_clean(
        x, prep, layer_id=-1)

    jax.block_until_ready(clean_out)
    jax.block_until_ready(clean_layer_outputs)
    jax.block_until_ready([t[0] for t in out_nz])
    jax.block_until_ready([t[0] for t in in_nz])
    jax.block_until_ready([t[0] for t in w_nz])

    print("KERNEL_OK")
</pallas_src>

<mosaic_0001>
module attributes {stable_mosaic.version = 11 : i64} {
  func.func @kernel(%arg0: i32, %arg1: memref<36x8xf32, #tpu.memory_space<vmem>>, %arg2: memref<1x1xi32, #tpu.memory_space<vmem>>) attributes {dimension_semantics = [#tpu.dimension_semantics<arbitrary>], iteration_bounds = array<i64: 1>, scalar_prefetch = 0 : i64, scratch_operands = 0 : i64, tpu.core_type = #tpu.core_type<tc>, window_params = [{transform_indices = @transform_0, window_bounds = array<i64: 36, 8>}, {pipeline_mode = #tpu.pipeline_mode<synchronous>, transform_indices = @transform_1, window_bounds = array<i64: 1, 1>}]} {
    %c0_i32 = arith.constant 0 : i32
    %0 = arith.cmpi eq, %arg0, %c0_i32 : i32
    %1 = arith.extui %0 : i1 to i32
    %c0_i32_0 = arith.constant 0 : i32
    %2 = arith.cmpi ne, %1, %c0_i32_0 : i32
    scf.if %2 {
      %c0_i32_8 = arith.constant 0 : i32
      %14 = vector.broadcast %c0_i32_8 : i32 to vector<1x1xi32>
      %c0_9 = arith.constant 0 : index
      %c0_10 = arith.constant 0 : index
      %15 = vector.load %arg2[%c0_9, %c0_10] : memref<1x1xi32, #tpu.memory_space<vmem>>, vector<1x1xi32>
      tpu.vector_store %arg2[%c0_9, %c0_10], %14 {strides = array<i32>} : memref<1x1xi32, #tpu.memory_space<vmem>>, vector<1x1xi32>,
    } else {
    }
    %c0 = arith.constant 0 : index
    %c0_1 = arith.constant 0 : index
    %3 = vector.load %arg1[%c0, %c0_1] : memref<36x8xf32, #tpu.memory_space<vmem>>, vector<36x8xf32>
    %cst = arith.constant 0.000000e+00 : f32
    %4 = vector.broadcast %cst : f32 to vector<36x8xf32>
    %5 = arith.cmpf one, %3, %4 : vector<36x8xf32>
    %6 = arith.extui %5 : vector<36x8xi1> to vector<36x8xi32>
    %c0_2 = arith.constant 0 : index
    %c0_3 = arith.constant 0 : index
    %7 = vector.load %arg2[%c0_2, %c0_3] : memref<1x1xi32, #tpu.memory_space<vmem>>, vector<1x1xi32>
    %cst_4 = arith.constant dense<0> : vector<36xi32>
    %8 = vector.multi_reduction <add>, %6, %cst_4 [1] : vector<36x8xi32> to vector<36xi32>
    %9 = vector.shape_cast %8 : vector<36xi32> to vector<36x1xi32>
    %cst_5 = arith.constant dense<0> : vector<1xi32>
    %10 = vector.multi_reduction <add>, %9, %cst_5 [0] : vector<36x1xi32> to vector<1xi32>
    %11 = vector.shape_cast %10 : vector<1xi32> to vector<1x1xi32>
    %12 = arith.addi %7, %11 : vector<1x1xi32>
    %c0_6 = arith.constant 0 : index
    %c0_7 = arith.constant 0 : index
    %13 = vector.load %arg2[%c0_6, %c0_7] : memref<1x1xi32, #tpu.memory_space<vmem>>, vector<1x1xi32>
    tpu.vector_store %arg2[%c0_6, %c0_7], %12 {strides = array<i32>} : memref<1x1xi32, #tpu.memory_space<vmem>>, vector<1x1xi32>,
    return
  }
  func.func @transform_0(%arg0: i32) -> (i32, i32) {
    %c0_i32 = arith.constant 0 : i32
    %c0_i32_0 = arith.constant 0 : i32
    return %c0_i32, %arg0 : i32, i32
  }
  func.func @transform_1(%arg0: i32) -> (i32, i32) {
    %c0_i32 = arith.constant 0 : i32
    %c0_i32_0 = arith.constant 0 : i32
    %c0_i32_1 = arith.constant 0 : i32
    return %c0_i32, %c0_i32_0 : i32, i32
  }
}

</mosaic_0001>

<llo_original>
// kernel: tpu_custom_call.1
$region0: #{tpu_custom_call.1}
  #allocation0 [shape = 'u32[]', space=smem, size = 0x4, offset = 0x4, fixed_abs, tag = 'smem constant byte address 0x4 - core index']
  #allocation1 [shape = 'u32[72,128]{1,0:T(1,128)}', space=vmem, size = 0x9000, scoped, tag = 'internal scratch']
  %s0 = inlined_call_operand.vmem [shape: f32[36,8], index: 0, kind: input, shape index: {}]
  %s1 = inlined_call_operand.hbm [shape: s32[1,1], index: 1, kind: output, shape index: {}]
  %s2 = sld [smem:[#allocation0]]
  $region18: #{tpu_custom_call.1} parent=0
    _
  %s4 = ssub.s32 1, %s2
  %s5 = scalar_select 0, %s4, %s2
  $region1: #{tpu_custom_call.1} parent=0
    #allocation2 [shape = 'u8[512]{0}', space=vmem, size = 0x400, scoped, tag = 'output window, operand 0, single buffered']
    #allocation3 [shape = 's32[1]{0}', space=sflag, size = 0x4, scoped, tag = 'scoped memory for tpu_custom_call.1']
    %6 = vsyncpa [#allocation3], 0
    // Predicated region
    $region2: #{tpu_custom_call.1} parent=1 // pred_check
      _
    $region3: #{tpu_custom_call.1} parent=1 // pred_check_branch
      %8 = sbr.rel (0) target = $region5
    $region4: #{tpu_custom_call.1} parent=1 // pred_region
      _
    $region5: #{tpu_custom_call.1} parent=1 // pred_fallthru
      _
    %p9 = scmp.eq.s32.totalorder 0, 0
    // Predicated region
    $region6: #{tpu_custom_call.1} parent=1 // pred_check
      %p10 = pneg %p9
    $region7: #{tpu_custom_call.1} parent=1 // pred_check_branch
      %12 = sbr.rel (%p10) target = $region9
    $region8: #{tpu_custom_call.1} parent=1 // pred_region
      %vm13 = vcmask 0
      %14 = vst.msk [vmem:[#allocation2] sm:$0x1] %vm13, 0
    $region9: #{tpu_custom_call.1} parent=1 // pred_fallthru
      _
    %v15 = vld [vmem:[%s0] sm:$0xff]
    %v16 = vld [vmem:[%s0 + $0x8] sm:$0xff]
    %v17 = vld [vmem:[%s0 + $0x10] sm:$0xff]
    %v18 = vld [vmem:[%s0 + $0x18] sm:$0xff]
    %v19 = vld [vmem:[%s0 + $0x20] sm:$0xf]
    %vm20 = vcmp.ne.f32.partialorder %v15, 0.0
    %vm21 = vcmp.ne.f32.partialorder %v16, 0.0
    %vm22 = vcmp.ne.f32.partialorder %v17, 0.0
    %vm23 = vcmp.ne.f32.partialorder %v18, 0.0
    %vm24 = vcmp.ne.f32.partialorder %v19, 0.0
    %v25 = vsel %vm20, 1, 0
    %v26 = vsel %vm21, 1, 0
    %v27 = vsel %vm22, 1, 0
    %v28 = vsel %vm23, 1, 0
    %v29 = vsel %vm24, 1, 0
    %v30 = vld [vmem:[#allocation2] sm:$0x1]
    %vm31 = vcmask 64512
    %v32 = vsel %vm31, %v25, 0
    %v33 = vand.u32 %v32, 65535
    %v34 = vshrl.u32 %v32, 16
    %v35 = vcvt.s32.f32 %v33
    %v36 = vcvt.s32.f32 %v34
    %37 = vadd.xlane.f32.xlu0 %v35
    %v38 = vpop.xlane.xlu0 %37
    %39 = vadd.xlane.f32.xlu0 %v36
    %v40 = vpop.xlane.xlu0 %39
    %v41 = vcvt.f32.s32 %v38
    %v42 = vcvt.f32.s32 %v40
    %v43 = vshll.u32 %v42, 16
    %v44 = vadd.s32 %v43, %v41
    %v45 = vsel %vm31, %v26, 0
    %v46 = vand.u32 %v45, 65535
    %v47 = vshrl.u32 %v45, 16
    %v48 = vcvt.s32.f32 %v46
    %v49 = vcvt.s32.f32 %v47
    %50 = vadd.xlane.f32.xlu0 %v48
    %v51 = vpop.xlane.xlu0 %50
    %52 = vadd.xlane.f32.xlu0 %v49
    %v53 = vpop.xlane.xlu0 %52
    %v54 = vcvt.f32.s32 %v51
    %v55 = vcvt.f32.s32 %v53
    %v56 = vshll.u32 %v55, 16
    %v57 = vadd.s32 %v56, %v54
    %v58 = vsel %vm31, %v27, 0
    %v59 = vand.u32 %v58, 65535
    %v60 = vshrl.u32 %v58, 16
    %v61 = vcvt.s32.f32 %v59
    %v62 = vcvt.s32.f32 %v60
    %63 = vadd.xlane.f32.xlu0 %v61
    %v64 = vpop.xlane.xlu0 %63
    %65 = vadd.xlane.f32.xlu0 %v62
    %v66 = vpop.xlane.xlu0 %65
    %v67 = vcvt.f32.s32 %v64
    %v68 = vcvt.f32.s32 %v66
    %v69 = vshll.u32 %v68, 16
    %v70 = vadd.s32 %v69, %v67
    %v71 = vsel %vm31, %v28, 0
    %v72 = vand.u32 %v71, 65535
    %v73 = vshrl.u32 %v71, 16
    %v74 = vcvt.s32.f32 %v72
    %v75 = vcvt.s32.f32 %v73
    %76 = vadd.xlane.f32.xlu0 %v74
    %v77 = vpop.xlane.xlu0 %76
    %78 = vadd.xlane.f32.xlu0 %v75
    %v79 = vpop.xlane.xlu0 %78
    %v80 = vcvt.f32.s32 %v77
    %v81 = vcvt.f32.s32 %v79
    %v82 = vshll.u32 %v81, 16
    %v83 = vadd.s32 %v82, %v80
    %vm84 = vcmask 60416
    %v85 = vsel %vm84, %v29, 0
    %v86 = vand.u32 %v85, 65535
    %v87 = vshrl.u32 %v85, 16
    %v88 = vcvt.s32.f32 %v86
    %v89 = vcvt.s32.f32 %v87
    %90 = vadd.xlane.f32.xlu0 %v88
    %v91 = vpop.xlane.xlu0 %90
    %92 = vadd.xlane.f32.xlu0 %v89
    %v93 = vpop.xlane.xlu0 %92
    %v94 = vcvt.f32.s32 %v91
    %v95 = vcvt.f32.s32 %v93
    %v96 = vshll.u32 %v95, 16
    %v97 = vadd.s32 %v96, %v94
    %vm98 = vcmask 1043456
    %v99 = vsel %vm98, %v97, 0
    %v100 = vadd.s32 %v44, %v99
    %v101 = vadd.s32 %v100, %v57
    %v102 = vadd.s32 %v70, %v83
    %v103 = vadd.s32 %v101, %v102
    %v104 = vrot.slane %v103, 4
    %v105 = vadd.s32 %v103, %v104
    %v106 = vrot.slane %v105, 2
    %v107 = vadd.s32 %v105, %v106
    %v108 = vrot.slane %v107, 1
    %v109 = vadd.s32 %v107, %v108
    %v110 = vadd.s32 %v30, %v109
    %vm111 = vcmask 0
    %112 = vst.msk [vmem:[#allocation2] sm:$0x1] %vm111, %v110
    // Predicated region
    $region10: #{tpu_custom_call.1} parent=1 // pred_check
      _
    $region11: #{tpu_custom_call.1} parent=1 // pred_check_branch
      %114 = sbr.rel (0) target = $region13
    $region12: #{tpu_custom_call.1} parent=1 // pred_region
      %116 = vsyncadd [#allocation3], 0
      %s118 = sshll.u32 [#allocation2], 4
      %s119 = int_to_ptr.vmem [resolvable:$true] %s118
      %s120 = sshll.u32 %s1, 4
      %s121 = int_to_ptr.hbm [resolvable:$true] %s120
      %123 = dma.vmem_to_hbm [thread:$0]  %s119, 16, %s121, [#allocation3]
    $region13: #{tpu_custom_call.1} parent=1 // pred_fallthru
      _
    // Predicated region
    $region14: #{tpu_custom_call.1} parent=1 // pred_check
      _
    $region15: #{tpu_custom_call.1} parent=1 // pred_check_branch
      %125 = sbr.rel (0) target = $region17
    $region16: #{tpu_custom_call.1} parent=1 // pred_region
      %127 = dma.done [#allocation3], 16
    $region17: #{tpu_custom_call.1} parent=1 // pred_fallthru
      _
    %128 = vsyncpa [#allocation3], 1

</llo_original>
